<compile_context>
chip_gen: v7x
topology: tpu7x:2x2x1
jax: 0.10.0
libtpu: 0.0.40
codegen_flags: <defaults>
</compile_context>

<pallas_src>
import jax
import jax.numpy as jnp
from jax.experimental import pallas as pl
from jax.experimental.pallas import tpu as pltpu


def _haar_dwt_kernel(x_ref, m_ref, ll_ref, hl_ref, lh_ref, hh_ref):
    """One grid step: an (RB, W) slab of whole image rows -> 4 band slabs.

    x_ref : (RB, W)      RB even; a slab never splits an (even, odd) row pair.
    m_ref : (W, 2*Wo)    fused [pair-sum | pair-diff] width matrix, *0.5.
    *_ref : (RB//2, Wo)  LL / HL / LH / HH output slabs.
    """
    half = x_ref.shape[0] // 2
    wo = m_ref.shape[1] // 2

    # Height pass: sublane-strided loads of even/odd rows directly from the
    # ref (keeps vreg pressure low), then one add + one sub in input dtype.
    xe = x_ref[pl.ds(0, half, stride=2), :]       # rows 0,2,4,...
    xo = x_ref[pl.ds(1, half, stride=2), :]       # rows 1,3,5,...
    lo_h = xe + xo                                # per 2x2 block: a+c | b+d
    hi_h = xe - xo                                # per 2x2 block: a-c | b-d

    # Width pass on the MXU: one fused RHS, two matmuls, f32 accumulation.
    m = m_ref[...]
    res_lo = jnp.dot(lo_h, m, preferred_element_type=jnp.float32)  # [LL | LH]
    res_hi = jnp.dot(hi_h, m, preferred_element_type=jnp.float32)  # [HL | HH]

    ll_ref[...] = res_lo[:, :wo].astype(ll_ref.dtype)
    lh_ref[...] = res_lo[:, wo:].astype(lh_ref.dtype)
    hl_ref[...] = res_hi[:, :wo].astype(hl_ref.dtype)
    hh_ref[...] = res_hi[:, wo:].astype(hh_ref.dtype)


def _haar_matrix(w, dtype):
    """(W, 2*Wo) fused width-combine matrix [pair-sum | pair-diff] with the
    total 2-D Haar scale of 0.5 folded in (0.5 is exact in bf16)."""
    wo = w // 2
    r = jnp.arange(w)[:, None]
    c = jnp.arange(wo)[None, :]
    even = r == 2 * c
    odd = r == 2 * c + 1
    m_sum = jnp.where(even | odd, 0.5, 0.0)
    m_diff = jnp.where(even, 0.5, jnp.where(odd, -0.5, 0.0))
    return jnp.concatenate([m_sum, m_diff], axis=1).astype(dtype)


def _padded_step_bytes(rb, w, wo, itemsize):
    """Padded VMEM footprint of one grid step's input + 4 output blocks."""
    lane = 128
    wp_in = -(-w // lane) * lane
    wp_out = -(-wo // lane) * lane
    return (rb * wp_in + 4 * (rb // 2) * wp_out) * itemsize


def _pick_rows_per_block(nc, h, w, itemsize, target_step_bytes=6 << 20):
    """Rows of the flat (N*C*H, W) input handled per grid step.

    Legal row counts rb must: be even, divide N*C*H, never straddle a plane
    boundary (rb % h == 0 for multi-plane slabs, or h % rb == 0 for
    intra-plane row chunks), and keep rb and rb//2 multiples of the dtype's
    sublane tile (8 for 4-byte, 16 for 2-byte, 32 for 1-byte).  Preference:
    the largest legal rb whose padded per-step footprint fits the budget and
    leaves >= 2 grid steps (ideally an even number, for v7x megacore
    balance).  Fallbacks shrink the block rather than grow it.
    """
    total_rows = nc * h
    wo = w // 2
    sub = max(8, 32 // itemsize)

    def legal(rb, align):
        if rb % 2 or total_rows % rb:
            return False
        if rb % align or (rb // 2) % align:
            return False
        return rb % h == 0 or h % rb == 0

    for align in (sub, 8):
        fits = [rb for rb in range(2, total_rows + 1, 2)
                if legal(rb, align)
                and _padded_step_bytes(rb, w, wo, itemsize) <= target_step_bytes]
        if not fits:
            continue
        multi = [rb for rb in fits if total_rows // rb >= 2]
        if multi:
            even_steps = [rb for rb in multi if (total_rows // rb) % 2 == 0]
            if even_steps and 2 * max(even_steps) >= max(multi):
                return max(even_steps)
            return max(multi)
        return max(fits)

    # Nothing fits the byte budget: smallest legal block, else full extent
    # (full extent is always layout-legal because block == array dims).
    for align in (sub, 8):
        cands = [rb for rb in range(2, total_rows + 1, 2) if legal(rb, align)]
        if cands:
            return min(cands)
    return total_rows


def down_wt(x):
    """Pallas TPU forward of Down_wt: single-level Haar DWT (mode='zero').

    x: (N, C, H, W) with even H, W.  Returns (yL, y_HL, y_LH, y_HH), each of
    shape (N, C, H//2, W//2) and dtype x.dtype, matching pytorch_wavelets'
    DWTForward(J=1, mode='zero', wave='haar') band order and signs.
    """
    N, C, H, W = x.shape
    assert H % 2 == 0 and W % 2 == 0, "Haar DWT kernel expects even H and W"
    NC = N * C
    Ho, Wo = H // 2, W // 2
    dtype = x.dtype
    itemsize = jnp.dtype(dtype).itemsize

    x2d = x.reshape(NC * H, W)                    # free row-major reshape
    m = _haar_matrix(W, dtype)                    # (W, 2*Wo) fused constant

    RB = _pick_rows_per_block(NC, H, W, itemsize)
    grid = ((NC * H) // RB,)

    step_bytes = _padded_step_bytes(RB, W, Wo, itemsize)
    # Double-buffered blocks + intermediates, clamped to a level that is safe
    # on every generation (v7x has only 64 MiB of VMEM per TensorCore).
    vmem_limit = max(32 << 20, min(3 * step_bytes + (4 << 20), 48 << 20))

    out_sds = jax.ShapeDtypeStruct((NC * Ho, Wo), dtype)
    x_spec = pl.BlockSpec((RB, W), lambda i: (i, 0))
    m_spec = pl.BlockSpec((W, 2 * Wo), lambda i: (0, 0))   # VMEM-resident const
    out_spec = pl.BlockSpec((RB // 2, Wo), lambda i: (i, 0))

    cost = pl.CostEstimate(
        flops=8 * NC * Ho * W * Wo,                # two (RB/2,W)x(W,2Wo) matmuls
        transcendentals=0,
        bytes_accessed=2 * NC * H * W * itemsize,  # read input + write 4 bands
    )

    ll, hl, lh, hh = pl.pallas_call(
        _haar_dwt_kernel,
        out_shape=(out_sds, out_sds, out_sds, out_sds),
        grid_spec=pl.GridSpec(
            grid=grid,
            in_specs=[x_spec, m_spec],
            out_specs=[out_spec, out_spec, out_spec, out_spec],
        ),
        compiler_params=pltpu.CompilerParams(
            dimension_semantics=("parallel",),
            vmem_limit_bytes=vmem_limit,
        ),
        cost_estimate=cost,
    )(x2d, m)

    shape = (N, C, Ho, Wo)
    return (ll.reshape(shape), hl.reshape(shape),
            lh.reshape(shape), hh.reshape(shape))


def _ref_down_wt(x):
    """Pure-JAX reference with pytorch_wavelets' haar/zero conventions."""
    a = x[..., 0::2, 0::2]
    b = x[..., 0::2, 1::2]
    c = x[..., 1::2, 0::2]
    d = x[..., 1::2, 1::2]
    yl = (a + b + c + d) * 0.5
    hl = (a + b - c - d) * 0.5
    lh = (a - b + c - d) * 0.5
    hh = (a - b - c + d) * 0.5
    return yl, hl, lh, hh


if __name__ == "__main__":
    key = jax.random.PRNGKey(0)
    x = jax.random.normal(key, (2, 4, 16, 16), dtype=jnp.float32)

    outs = jax.block_until_ready(down_wt(x))
    refs = _ref_down_wt(x)
    for name, o, r in zip(("yL", "y_HL", "y_LH", "y_HH"), outs, refs):
        assert o.shape == (2, 4, 8, 8), (name, o.shape)
        assert o.dtype == x.dtype, (name, o.dtype)
        assert jnp.allclose(o, r, atol=1e-5, rtol=1e-5), name

    print("KERNEL_OK")
</pallas_src>

<mosaic_0001>
module attributes {stable_mosaic.version = 11 : i64} {
  func.func @_haar_dwt_kernel(%arg0: i32, %arg1: memref<64x16xf32, #tpu.memory_space<vmem>>, %arg2: memref<16x16xf32, #tpu.memory_space<vmem>>, %arg3: memref<32x8xf32, #tpu.memory_space<vmem>>, %arg4: memref<32x8xf32, #tpu.memory_space<vmem>>, %arg5: memref<32x8xf32, #tpu.memory_space<vmem>>, %arg6: memref<32x8xf32, #tpu.memory_space<vmem>>) attributes {dimension_semantics = [#tpu.dimension_semantics<parallel>], iteration_bounds = array<i64: 2>, scalar_prefetch = 0 : i64, scratch_operands = 0 : i64, tpu.core_type = #tpu.core_type<tc>, window_params = [{transform_indices = @transform_0, window_bounds = array<i64: 64, 16>}, {pipeline_mode = #tpu.pipeline_mode<synchronous>, transform_indices = @transform_1, window_bounds = array<i64: 16, 16>}, {transform_indices = @transform_2, window_bounds = array<i64: 32, 8>}, {transform_indices = @transform_3, window_bounds = array<i64: 32, 8>}, {transform_indices = @transform_4, window_bounds = array<i64: 32, 8>}, {transform_indices = @transform_5, window_bounds = array<i64: 32, 8>}]} {
    %c0 = arith.constant 0 : index
    %c0_0 = arith.constant 0 : index
    %0 = tpu.strided_load %arg1[%c0, %c0_0] {strides = array<i32: 2, 1>} : memref<64x16xf32, #tpu.memory_space<vmem>>, vector<32x16xf32>
    %c1 = arith.constant 1 : index
    %c0_1 = arith.constant 0 : index
    %1 = tpu.strided_load %arg1[%c1, %c0_1] {strides = array<i32: 2, 1>} : memref<64x16xf32, #tpu.memory_space<vmem>>, vector<32x16xf32>
    %2 = arith.addf %0, %1 : vector<32x16xf32>
    %3 = arith.subf %0, %1 : vector<32x16xf32>
    %c0_2 = arith.constant 0 : index
    %c0_3 = arith.constant 0 : index
    %4 = vector.load %arg2[%c0_2, %c0_3] : memref<16x16xf32, #tpu.memory_space<vmem>>, vector<16x16xf32>
    %cst = arith.constant dense<0.000000e+00> : vector<32x16xf32>
    %5 = tpu.matmul %2, %4, %cst {dimension_numbers = #tpu.dot_dimension_numbers<[1], [0], [0], [1], [0, 0, 1, 1], [], []>} : vector<32x16xf32>, vector<16x16xf32>, vector<32x16xf32> -> vector<32x16xf32>
    %cst_4 = arith.constant dense<0.000000e+00> : vector<32x16xf32>
    %6 = tpu.matmul %3, %4, %cst_4 {dimension_numbers = #tpu.dot_dimension_numbers<[1], [0], [0], [1], [0, 0, 1, 1], [], []>} : vector<32x16xf32>, vector<16x16xf32>, vector<32x16xf32> -> vector<32x16xf32>
    %7 = vector.extract_strided_slice %5 {offsets = [0, 0], sizes = [32, 8], strides = [1, 1]} : vector<32x16xf32> to vector<32x8xf32>
    %c0_5 = arith.constant 0 : index
    %c0_6 = arith.constant 0 : index
    %8 = vector.load %arg3[%c0_5, %c0_6] : memref<32x8xf32, #tpu.memory_space<vmem>>, vector<32x8xf32>
    tpu.vector_store %arg3[%c0_5, %c0_6], %7 {strides = array<i32>} : memref<32x8xf32, #tpu.memory_space<vmem>>, vector<32x8xf32>,
    %9 = vector.extract_strided_slice %5 {offsets = [0, 8], sizes = [32, 8], strides = [1, 1]} : vector<32x16xf32> to vector<32x8xf32>
    %c0_7 = arith.constant 0 : index
    %c0_8 = arith.constant 0 : index
    %10 = vector.load %arg5[%c0_7, %c0_8] : memref<32x8xf32, #tpu.memory_space<vmem>>, vector<32x8xf32>
    tpu.vector_store %arg5[%c0_7, %c0_8], %9 {strides = array<i32>} : memref<32x8xf32, #tpu.memory_space<vmem>>, vector<32x8xf32>,
    %11 = vector.extract_strided_slice %6 {offsets = [0, 0], sizes = [32, 8], strides = [1, 1]} : vector<32x16xf32> to vector<32x8xf32>
    %c0_9 = arith.constant 0 : index
    %c0_10 = arith.constant 0 : index
    %12 = vector.load %arg4[%c0_9, %c0_10] : memref<32x8xf32, #tpu.memory_space<vmem>>, vector<32x8xf32>
    tpu.vector_store %arg4[%c0_9, %c0_10], %11 {strides = array<i32>} : memref<32x8xf32, #tpu.memory_space<vmem>>, vector<32x8xf32>,
    %13 = vector.extract_strided_slice %6 {offsets = [0, 8], sizes = [32, 8], strides = [1, 1]} : vector<32x16xf32> to vector<32x8xf32>
    %c0_11 = arith.constant 0 : index
    %c0_12 = arith.constant 0 : index
    %14 = vector.load %arg6[%c0_11, %c0_12] : memref<32x8xf32, #tpu.memory_space<vmem>>, vector<32x8xf32>
    tpu.vector_store %arg6[%c0_11, %c0_12], %13 {strides = array<i32>} : memref<32x8xf32, #tpu.memory_space<vmem>>, vector<32x8xf32>,
    return
  }
  func.func @transform_0(%arg0: i32) -> (i32, i32) {
    %c0_i32 = arith.constant 0 : i32
    %c0_i32_0 = arith.constant 0 : i32
    return %arg0, %c0_i32 : i32, i32
  }
  func.func @transform_1(%arg0: i32) -> (i32, i32) {
    %c0_i32 = arith.constant 0 : i32
    %c0_i32_0 = arith.constant 0 : i32
    %c0_i32_1 = arith.constant 0 : i32
    return %c0_i32, %c0_i32_0 : i32, i32
  }
  func.func @transform_2(%arg0: i32) -> (i32, i32) {
    %c0_i32 = arith.constant 0 : i32
    %c0_i32_0 = arith.constant 0 : i32
    return %arg0, %c0_i32 : i32, i32
  }
  func.func @transform_3(%arg0: i32) -> (i32, i32) {
    %c0_i32 = arith.constant 0 : i32
    %c0_i32_0 = arith.constant 0 : i32
    return %arg0, %c0_i32 : i32, i32
  }
  func.func @transform_4(%arg0: i32) -> (i32, i32) {
    %c0_i32 = arith.constant 0 : i32
    %c0_i32_0 = arith.constant 0 : i32
    return %arg0, %c0_i32 : i32, i32
  }
  func.func @transform_5(%arg0: i32) -> (i32, i32) {
    %c0_i32 = arith.constant 0 : i32
    %c0_i32_0 = arith.constant 0 : i32
    return %arg0, %c0_i32 : i32, i32
  }
}

</mosaic_0001>

<llo_original>
// kernel: tpu_custom_call.1
$region0: #{tpu_custom_call.1}
  #allocation0 [shape = 'u32[]', space=smem, size = 0x4, offset = 0x4, fixed_abs, tag = 'smem constant byte address 0x4 - core index']
  #allocation1 [shape = 'u32[144,128]{1,0:T(1,128)}', space=vmem, size = 0x12000, scoped, tag = 'internal scratch']
  %s0 = inlined_call_operand.vmem [shape: f32[128,16], index: 0, kind: input, shape index: {}]
  %s1 = inlined_call_operand.vmem [shape: f32[16,16], index: 1, kind: input, shape index: {}]
  %s2 = inlined_call_operand.vmem [shape: f32[64,8], index: 2, kind: output, shape index: {0}]
  %s3 = inlined_call_operand.vmem [shape: f32[64,8], index: 3, kind: output, shape index: {1}]
  %s4 = inlined_call_operand.vmem [shape: f32[64,8], index: 4, kind: output, shape index: {2}]
  %s5 = inlined_call_operand.vmem [shape: f32[64,8], index: 5, kind: output, shape index: {3}]
  %6 = xla_tuple %s2, %s3, %s4, %s5
  %s7 = sld [smem:[#allocation0]]
  $region65: #{tpu_custom_call.1} parent=0
    _
  %s9 = ssub.s32 1, %s7
  %s10 = scalar_select 0, %s9, %s7
  loop: start=0, step=1, limit=4
  $region2: #{tpu_custom_call.1} parent=0 // loop_pre_header
    _
  $region3: #{tpu_custom_call.1} parent=0 // loop_header
    %s12 = sphi 0, %s16
    %p13 = scmp.ge.s32.totalorder %s12, 4
    %s22 = sphi 0, %s24
    %s25 = sphi 0, %s22
    %s26 = sphi 0, %s25
    %s42 = sphi 0, %s26
    %s46 = sphi 0, %s46
    %s48 = sphi 0, %s46
    %s49 = sphi 0, %s48
    %s63 = sphi 0, %s49
    %s69 = sphi 0, %s71
    %s72 = sphi 0, %s69
    %s73 = sphi 0, %s72
    %s89 = sphi 0, %s73
    %s95 = sphi 0, %s97
    %s98 = sphi 0, %s95
    %s99 = sphi 0, %s98
    %s115 = sphi 0, %s99
    %s121 = sphi 0, %s123
    %s124 = sphi 0, %s121
    %s125 = sphi 0, %s124
    %s141 = sphi 0, %s125
    %s147 = sphi 0, %s149
    %s150 = sphi 0, %s147
    %s151 = sphi 0, %s150
    %s167 = sphi 0, %s151
  $region4: #{tpu_custom_call.1} parent=0 // loop_header_branch
    %15 = sbr.rel (%p13) target = $region8
  $region5: #{tpu_custom_call.1} parent=0 // loop_body
    %s17 = ssub.s32 %s12, 1
    %s18 = ssub.s32 %s12, 2
    %s19 = sadd.s32 %s12, 1
    %s20 = ssub.s32 %s12, %s19
    %p21 = scmp.eq.s32.totalorder %s20, 0
    %s23 = sadd.s32 %s22, 1
    %s24 = scalar_select %p21, %s22, %s23
    %p27 = pneg %p21
    %p28 = scmp.eq.s32.totalorder %s12, 1
    %p29 = por %p27, %p28
    %p30 = scmp.ne.s32.totalorder %s22, %s25
    %p31 = scmp.eq.s32.totalorder %s12, 0
    %p32 = por %p30, %p31
    %p33 = scmp.ne.s32.totalorder %s22, %s25
    %p34 = scmp.eq.s32.totalorder %s17, 1
    %p35 = por %p33, %p34
    %p36 = scmp.ne.s32.totalorder %s25, %s26
    %p37 = scmp.eq.s32.totalorder %s17, 0
    %p38 = por %p36, %p37
    %p39 = scmp.ne.s32.totalorder %s25, %s26
    %p40 = scmp.eq.s32.totalorder %s18, 1
    %p41 = por %p39, %p40
    %p43 = scmp.ne.s32.totalorder %s26, %s42
    %p44 = scmp.eq.s32.totalorder %s18, 0
    %p45 = por %p43, %p44
    %s47 = sadd.s32 %s46, 1
    %p50 = scmp.eq.s32.totalorder %s12, 1
    %p51 = scmp.ne.s32.totalorder %s46, %s48
    %p52 = scmp.eq.s32.totalorder %s12, 0
    %p53 = por %p51, %p52
    %p54 = scmp.ne.s32.totalorder %s46, %s48
    %p55 = scmp.eq.s32.totalorder %s17, 1
    %p56 = por %p54, %p55
    %p57 = scmp.ne.s32.totalorder %s48, %s49
    %p58 = scmp.eq.s32.totalorder %s17, 0
    %p59 = por %p57, %p58
    %p60 = scmp.ne.s32.totalorder %s48, %s49
    %p61 = scmp.eq.s32.totalorder %s18, 1
    %p62 = por %p60, %p61
    %p64 = scmp.ne.s32.totalorder %s49, %s63
    %p65 = scmp.eq.s32.totalorder %s18, 0
    %p66 = por %p64, %p65
    %s67 = ssub.s32 %s12, %s19
    %p68 = scmp.eq.s32.totalorder %s67, 0
    %s70 = sadd.s32 %s69, 1
    %s71 = scalar_select %p68, %s69, %s70
    %p74 = pneg %p68
    %p75 = scmp.eq.s32.totalorder %s12, 1
    %p76 = por %p74, %p75
    %p77 = scmp.ne.s32.totalorder %s69, %s72
    %p78 = scmp.eq.s32.totalorder %s12, 0
    %p79 = por %p77, %p78
    %p80 = scmp.ne.s32.totalorder %s69, %s72
    %p81 = scmp.eq.s32.totalorder %s17, 1
    %p82 = por %p80, %p81
    %p83 = scmp.ne.s32.totalorder %s72, %s73
    %p84 = scmp.eq.s32.totalorder %s17, 0
    %p85 = por %p83, %p84
    %p86 = scmp.ne.s32.totalorder %s72, %s73
    %p87 = scmp.eq.s32.totalorder %s18, 1
    %p88 = por %p86, %p87
    %p90 = scmp.ne.s32.totalorder %s73, %s89
    %p91 = scmp.eq.s32.totalorder %s18, 0
    %p92 = por %p90, %p91
    %s93 = ssub.s32 %s12, %s19
    %p94 = scmp.eq.s32.totalorder %s93, 0
    %s96 = sadd.s32 %s95, 1
    %s97 = scalar_select %p94, %s95, %s96
    %p100 = pneg %p94
    %p101 = scmp.eq.s32.totalorder %s12, 1
    %p102 = por %p100, %p101
    %p103 = scmp.ne.s32.totalorder %s95, %s98
    %p104 = scmp.eq.s32.totalorder %s12, 0
    %p105 = por %p103, %p104
    %p106 = scmp.ne.s32.totalorder %s95, %s98
    %p107 = scmp.eq.s32.totalorder %s17, 1
    %p108 = por %p106, %p107
    %p109 = scmp.ne.s32.totalorder %s98, %s99
    %p110 = scmp.eq.s32.totalorder %s17, 0
    %p111 = por %p109, %p110
    %p112 = scmp.ne.s32.totalorder %s98, %s99
    %p113 = scmp.eq.s32.totalorder %s18, 1
    %p114 = por %p112, %p113
    %p116 = scmp.ne.s32.totalorder %s99, %s115
    %p117 = scmp.eq.s32.totalorder %s18, 0
    %p118 = por %p116, %p117
    %s119 = ssub.s32 %s12, %s19
    %p120 = scmp.eq.s32.totalorder %s119, 0
    %s122 = sadd.s32 %s121, 1
    %s123 = scalar_select %p120, %s121, %s122
    %p126 = pneg %p120
    %p127 = scmp.eq.s32.totalorder %s12, 1
    %p128 = por %p126, %p127
    %p129 = scmp.ne.s32.totalorder %s121, %s124
    %p130 = scmp.eq.s32.totalorder %s12, 0
    %p131 = por %p129, %p130
    %p132 = scmp.ne.s32.totalorder %s121, %s124
    %p133 = scmp.eq.s32.totalorder %s17, 1
    %p134 = por %p132, %p133
    %p135 = scmp.ne.s32.totalorder %s124, %s125
    %p136 = scmp.eq.s32.totalorder %s17, 0
    %p137 = por %p135, %p136
    %p138 = scmp.ne.s32.totalorder %s124, %s125
    %p139 = scmp.eq.s32.totalorder %s18, 1
    %p140 = por %p138, %p139
    %p142 = scmp.ne.s32.totalorder %s125, %s141
    %p143 = scmp.eq.s32.totalorder %s18, 0
    %p144 = por %p142, %p143
    %s145 = ssub.s32 %s12, %s19
    %p146 = scmp.eq.s32.totalorder %s145, 0
    %s148 = sadd.s32 %s147, 1
    %s149 = scalar_select %p146, %s147, %s148
    %p152 = pneg %p146
    %p153 = scmp.eq.s32.totalorder %s12, 1
    %p154 = por %p152, %p153
    %p155 = scmp.ne.s32.totalorder %s147, %s150
    %p156 = scmp.eq.s32.totalorder %s12, 0
    %p157 = por %p155, %p156
    %p158 = scmp.ne.s32.totalorder %s147, %s150
    %p159 = scmp.eq.s32.totalorder %s17, 1
    %p160 = por %p158, %p159
    %p161 = scmp.ne.s32.totalorder %s150, %s151
    %p162 = scmp.eq.s32.totalorder %s17, 0
    %p163 = por %p161, %p162
    %p164 = scmp.ne.s32.totalorder %s150, %s151
    %p165 = scmp.eq.s32.totalorder %s18, 1
    %p166 = por %p164, %p165
    %p168 = scmp.ne.s32.totalorder %s151, %s167
    %p169 = scmp.eq.s32.totalorder %s18, 0
    %p170 = por %p168, %p169
    %p171 = scmp.le.s32.totalorder 1, %s12
    %p172 = scmp.lt.s32.totalorder %s12, 3
    %p173 = pnand %p171, %p172
    %p174 = pneg %p173
    // Predicated region
    $region9: #{tpu_custom_call.1} parent=5 // pred_check
      _
    $region10: #{tpu_custom_call.1} parent=5 // pred_check_branch
      %176 = sbr.rel (%p173) target = $region12
    $region11: #{tpu_custom_call.1} parent=5 // pred_region
      %s177 = ssub.s32 %s12, 1
      // Predicated region
      $region13: #{tpu_custom_call.1} parent=11 // pred_check
        %p178 = pneg %p59
      $region14: #{tpu_custom_call.1} parent=11 // pred_check_branch
        %180 = sbr.rel (%p178) target = $region16
      $region15: #{tpu_custom_call.1} parent=11 // pred_region
        _
      $region16: #{tpu_custom_call.1} parent=11 // pred_fallthru
        _
    $region12: #{tpu_custom_call.1} parent=5 // pred_fallthru
      _
    %p181 = scmp.lt.s32.totalorder %s12, 2
    // Predicated region
    $region17: #{tpu_custom_call.1} parent=5 // pred_check
      %p182 = pneg %p181
    $region18: #{tpu_custom_call.1} parent=5 // pred_check_branch
      %184 = sbr.rel (%p182) target = $region20
    $region19: #{tpu_custom_call.1} parent=5 // pred_region
      // Predicated region
      $region21: #{tpu_custom_call.1} parent=19 // pred_check
        %p185 = pneg %p32
      $region22: #{tpu_custom_call.1} parent=19 // pred_check_branch
        %187 = sbr.rel (%p185) target = $region24
      $region23: #{tpu_custom_call.1} parent=19 // pred_region
        %s188 = smul.u32 8, %s12
        %p189 = scmp.lt.s32.totalorder %s188, 15
        %s190 = scalar_select %p189, %s188, 15
        %s191 = smul.addr %s190, 8
        %s192 = scalar_lea.vmem %s0, %s191
        %s193 = smul.u32 8, %s12
      $region24: #{tpu_custom_call.1} parent=19 // pred_fallthru
        _
    $region20: #{tpu_custom_call.1} parent=5 // pred_fallthru
      _
    %p194 = scmp.le.s32.totalorder 1, %s12
    %p195 = scmp.lt.s32.totalorder %s12, 3
    %p196 = pnand %p194, %p195
    %p197 = pneg %p196
    // Predicated region
    $region25: #{tpu_custom_call.1} parent=5 // pred_check
      _
    $region26: #{tpu_custom_call.1} parent=5 // pred_check_branch
      %199 = sbr.rel (%p196) target = $region28
    $region27: #{tpu_custom_call.1} parent=5 // pred_region
      %s200 = ssub.s32 %s12, 1
      %s201 = smul.u32 8, %s17
      %p202 = scmp.lt.s32.totalorder %s201, 15
      %s203 = scalar_select %p202, %s201, 15
      %s204 = smul.addr %s203, 8
      %s205 = scalar_lea.vmem %s0, %s204
      %p206 = pneg %p38
      %p207 = pneg %p35
      %p208 = pneg %p59
      %p209 = pneg %p56
      %p210 = pneg %p85
      %p211 = pneg %p82
      %s212 = smul.u32 4, %s17
      %p213 = scmp.lt.s32.totalorder %s212, 7
      %s214 = scalar_select %p213, %s212, 7
      %s215 = smul.addr %s214, 8
      %s216 = scalar_lea.vmem %s2, %s215
      %p217 = pneg %p111
      %p218 = pneg %p108
      %s219 = smul.u32 4, %s17
      %p220 = scmp.lt.s32.totalorder %s219, 7
      %s221 = scalar_select %p220, %s219, 7
      %s222 = smul.addr %s221, 8
      %s223 = scalar_lea.vmem %s3, %s222
      %p224 = pneg %p137
      %p225 = pneg %p134
      %s226 = smul.u32 4, %s17
      %p227 = scmp.lt.s32.totalorder %s226, 7
      %s228 = scalar_select %p227, %s226, 7
      %s229 = smul.addr %s228, 8
      %s230 = scalar_lea.vmem %s4, %s229
      %p231 = pneg %p163
      %p232 = pneg %p160
      %s233 = smul.u32 4, %s17
      %p234 = scmp.lt.s32.totalorder %s233, 7
      %s235 = scalar_select %p234, %s233, 7
      %s236 = smul.addr %s235, 8
      %s237 = scalar_lea.vmem %s5, %s236
      %s238 = smul.u32 8, %s17
      %p239 = scmp.lt.s32.totalorder %s238, 15
      %s240 = scalar_select %p239, %s238, 15
      %s241 = smul.addr %s240, 8
      %s242 = scalar_lea.vmem %s0, %s241
      %s243 = smul.u32 8, %s17
      %s244 = smul.u32 4, %s17
      %p245 = scmp.lt.s32.totalorder %s244, 7
      %s246 = scalar_select %p245, %s244, 7
      %s247 = smul.addr %s246, 8
      %s248 = scalar_lea.vmem %s2, %s247
      %s249 = smul.u32 4, %s17
      %s250 = smul.u32 4, %s17
      %p251 = scmp.lt.s32.totalorder %s250, 7
      %s252 = scalar_select %p251, %s250, 7
      %s253 = smul.addr %s252, 8
      %s254 = scalar_lea.vmem %s3, %s253
      %s255 = smul.u32 4, %s17
      %s256 = smul.u32 4, %s17
      %p257 = scmp.lt.s32.totalorder %s256, 7
      %s258 = scalar_select %p257, %s256, 7
      %s259 = smul.addr %s258, 8
      %s260 = scalar_lea.vmem %s4, %s259
      %s261 = smul.u32 4, %s17
      %s262 = smul.u32 4, %s17
      %p263 = scmp.lt.s32.totalorder %s262, 7
      %s264 = scalar_select %p263, %s262, 7
      %s265 = smul.addr %s264, 8
      %s266 = scalar_lea.vmem %s5, %s265
      %s267 = smul.u32 4, %s17
      %v268 = vld [vmem:[%s242] ss:$2 sm:$0xff]
      %s269 = scalar_lea.vmem %s242, 16
      %v270 = vld [vmem:[%s269] ss:$2 sm:$0xff]
      %s271 = scalar_lea.vmem %s242, 32
      %v272 = vld [vmem:[%s271] ss:$2 sm:$0xff]
      %s273 = scalar_lea.vmem %s242, 48
      %v274 = vld [vmem:[%s273] ss:$2 sm:$0xff]
      %s275 = scalar_lea.vmem %s242, 1
      %v276 = vld [vmem:[%s275] ss:$2 sm:$0xff]
      %s277 = scalar_lea.vmem %s242, 17
      %v278 = vld [vmem:[%s277] ss:$2 sm:$0xff]
      %s279 = scalar_lea.vmem %s242, 33
      %v280 = vld [vmem:[%s279] ss:$2 sm:$0xff]
      %s281 = scalar_lea.vmem %s242, 49
      %v282 = vld [vmem:[%s281] ss:$2 sm:$0xff]
      %v283 = vadd.f32 %v268, %v276
      %v284 = vadd.f32 %v270, %v278
      %v285 = vadd.f32 %v272, %v280
      %v286 = vadd.f32 %v274, %v282
      %v287 = vsub.f32 %v268, %v276
      %v288 = vsub.f32 %v270, %v278
      %v289 = vsub.f32 %v272, %v280
      %v290 = vsub.f32 %v274, %v282
      %v291 = vld [vmem:[%s1] sm:$0xff]
      %v292 = vld [vmem:[%s1 + $0x8] sm:$0xff]
      %vm293 = vcmask 130048
      %v295 = vsel %vm293, %v283, 0
      %v298 = vsel %vm293, %v284, 0
      %v301 = vsel %vm293, %v285, 0
      %v304 = vsel %vm293, %v286, 0
      %306 = vmatprep.subr.mxu0 0.0
      %307 = vmatpush1.msra.mxu0 %v291
      %308 = vmatprep.subr.mxu0 0.0
      %309 = vmatpush1.msra.mxu0 %v292
      %310 = vmatprep.subr.mxu0 0.0
      %311 = vmatpush1.msra.mxu0 0.0
      %312 = vmatprep.subr.mxu0 0.0
      %313 = vmatpush1.msra.mxu0 0.0
      %314 = vmatprep.subr.mxu0 0.0
      %315 = vmatpush1.msra.mxu0 0.0
      %316 = vmatprep.subr.mxu0 0.0
      %317 = vmatpush1.msra.mxu0 0.0
      %318 = vmatprep.subr.mxu0 0.0
      %319 = vmatpush1.msra.mxu0 0.0
      %320 = vmatprep.subr.mxu0 0.0
      %321 = vmatpush1.msra.mxu0 0.0
      %322 = vmatprep.subr.mxu0 0.0
      %323 = vmatpush1.msra.mxu0 0.0
      %324 = vmatprep.subr.mxu0 0.0
      %325 = vmatpush1.msra.mxu0 0.0
      %326 = vmatprep.subr.mxu0 0.0
      %327 = vmatpush1.msra.mxu0 0.0
      %328 = vmatprep.subr.mxu0 0.0
      %329 = vmatpush1.msra.mxu0 0.0
      %330 = vmatprep.subr.mxu0 0.0
      %331 = vmatpush1.msra.mxu0 0.0
      %332 = vmatprep.subr.mxu0 0.0
      %333 = vmatpush1.msra.mxu0 0.0
      %334 = vmatprep.subr.mxu0 0.0
      %335 = vmatpush1.msra.mxu0 0.0
      %336 = vmatprep.subr.mxu0 0.0
      %337 = vmatpush1.msra.mxu0 0.0
      %338 = vmatprep.subr.mxu0 0.0
      %339 = vmatpush1.msra.mxu0 0.0
      %340 = vmatprep.subr.mxu0 0.0
      %341 = vmatpush1.msra.mxu0 0.0
      %342 = vmatprep.subr.mxu0 0.0
      %343 = vmatpush1.msra.mxu0 0.0
      %344 = vmatprep.subr.mxu0 0.0
      %345 = vmatpush1.msra.mxu0 0.0
      %346 = vmatprep.subr.mxu0 0.0
      %347 = vmatpush1.msra.mxu0 0.0
      %348 = vmatprep.subr.mxu0 0.0
      %349 = vmatpush1.msra.mxu0 0.0
      %350 = vmatprep.subr.mxu0 0.0
      %351 = vmatpush1.msra.mxu0 0.0
      %352 = vmatprep.subr.mxu0 0.0
      %353 = vmatpush1.msra.mxu0 0.0
      %354 = vmatprep.subr.mxu0 0.0
      %355 = vmatpush1.msra.mxu0 0.0
      %356 = vmatprep.subr.mxu0 0.0
      %357 = vmatpush1.msra.mxu0 0.0
      %358 = vmatprep.subr.mxu0 0.0
      %359 = vmatpush1.msra.mxu0 0.0
      %360 = vmatprep.subr.mxu0 0.0
      %361 = vmatpush1.msra.mxu0 0.0
      %362 = vmatprep.subr.mxu0 0.0
      %363 = vmatpush1.msra.mxu0 0.0
      %364 = vmatprep.subr.mxu0 0.0
      %365 = vmatpush1.msra.mxu0 0.0
      %366 = vmatprep.subr.mxu0 0.0
      %367 = vmatpush1.msra.mxu0 0.0
      %368 = vmatprep.subr.mxu0 0.0
      %369 = vmatpush1.msra.mxu0 0.0
      %370 = vmatprep.mubr.f32.mxu0 0.0
      %371 = vmatmul.mubr.f32.gmra.mrb[0].mxu0 %v295
      %v372 = vpop.f32.mrb[0].mxu0
      %v373 = vadd.f32 0.0, %v372
      %v374 = vpop.f32.mrb[0].mxu0
      %375 = vmatprep.mubr.f32.mxu0 0.0
      %376 = vmatmul.mubr.f32.gmra.mrb[0].mxu0 %v298
      %v377 = vpop.f32.mrb[0].mxu0
      %v378 = vadd.f32 0.0, %v377
      %v379 = vpop.f32.mrb[0].mxu0
      %380 = vmatprep.mubr.f32.mxu0 0.0
      %381 = vmatmul.mubr.f32.gmra.mrb[0].mxu0 %v301
      %v382 = vpop.f32.mrb[0].mxu0
      %v383 = vadd.f32 0.0, %v382
      %v384 = vpop.f32.mrb[0].mxu0
      %385 = vmatprep.mubr.f32.mxu0 0.0
      %386 = vmatmul.mubr.f32.gmra.mrb[0].mxu0 %v304
      %v387 = vpop.f32.mrb[0].mxu0
      %v388 = vadd.f32 0.0, %v387
      %v389 = vpop.f32.mrb[0].mxu0
      %390 = vdwg.mxu0
      %v392 = vsel %vm293, %v287, 0
      %v395 = vsel %vm293, %v288, 0
      %v398 = vsel %vm293, %v289, 0
      %v401 = vsel %vm293, %v290, 0
      %403 = vmatprep.subr.mxu0 0.0
      %404 = vmatpush1.msra.mxu0 %v291
      %405 = vmatprep.subr.mxu0 0.0
      %406 = vmatpush1.msra.mxu0 %v292
      %407 = vmatprep.subr.mxu0 0.0
      %408 = vmatpush1.msra.mxu0 0.0
      %409 = vmatprep.subr.mxu0 0.0
      %410 = vmatpush1.msra.mxu0 0.0
      %411 = vmatprep.subr.mxu0 0.0
      %412 = vmatpush1.msra.mxu0 0.0
      %413 = vmatprep.subr.mxu0 0.0
      %414 = vmatpush1.msra.mxu0 0.0
      %415 = vmatprep.subr.mxu0 0.0
      %416 = vmatpush1.msra.mxu0 0.0
      %417 = vmatprep.subr.mxu0 0.0
      %418 = vmatpush1.msra.mxu0 0.0
      %419 = vmatprep.subr.mxu0 0.0
      %420 = vmatpush1.msra.mxu0 0.0
      %421 = vmatprep.subr.mxu0 0.0
      %422 = vmatpush1.msra.mxu0 0.0
      %423 = vmatprep.subr.mxu0 0.0
      %424 = vmatpush1.msra.mxu0 0.0
      %425 = vmatprep.subr.mxu0 0.0
      %426 = vmatpush1.msra.mxu0 0.0
      %427 = vmatprep.subr.mxu0 0.0
      %428 = vmatpush1.msra.mxu0 0.0
      %429 = vmatprep.subr.mxu0 0.0
      %430 = vmatpush1.msra.mxu0 0.0
      %431 = vmatprep.subr.mxu0 0.0
      %432 = vmatpush1.msra.mxu0 0.0
      %433 = vmatprep.subr.mxu0 0.0
      %434 = vmatpush1.msra.mxu0 0.0
      %435 = vmatprep.subr.mxu0 0.0
      %436 = vmatpush1.msra.mxu0 0.0
      %437 = vmatprep.subr.mxu0 0.0
      %438 = vmatpush1.msra.mxu0 0.0
      %439 = vmatprep.subr.mxu0 0.0
      %440 = vmatpush1.msra.mxu0 0.0
      %441 = vmatprep.subr.mxu0 0.0
      %442 = vmatpush1.msra.mxu0 0.0
      %443 = vmatprep.subr.mxu0 0.0
      %444 = vmatpush1.msra.mxu0 0.0
      %445 = vmatprep.subr.mxu0 0.0
      %446 = vmatpush1.msra.mxu0 0.0
      %447 = vmatprep.subr.mxu0 0.0
      %448 = vmatpush1.msra.mxu0 0.0
      %449 = vmatprep.subr.mxu0 0.0
      %450 = vmatpush1.msra.mxu0 0.0
      %451 = vmatprep.subr.mxu0 0.0
      %452 = vmatpush1.msra.mxu0 0.0
      %453 = vmatprep.subr.mxu0 0.0
      %454 = vmatpush1.msra.mxu0 0.0
      %455 = vmatprep.subr.mxu0 0.0
      %456 = vmatpush1.msra.mxu0 0.0
      %457 = vmatprep.subr.mxu0 0.0
      %458 = vmatpush1.msra.mxu0 0.0
      %459 = vmatprep.subr.mxu0 0.0
      %460 = vmatpush1.msra.mxu0 0.0
      %461 = vmatprep.subr.mxu0 0.0
      %462 = vmatpush1.msra.mxu0 0.0
      %463 = vmatprep.subr.mxu0 0.0
      %464 = vmatpush1.msra.mxu0 0.0
      %465 = vmatprep.subr.mxu0 0.0
      %466 = vmatpush1.msra.mxu0 0.0
      %467 = vmatprep.mubr.f32.mxu0 0.0
      %468 = vmatmul.mubr.f32.gmra.mrb[0].mxu0 %v392
      %v469 = vpop.f32.mrb[0].mxu0
      %v470 = vadd.f32 0.0, %v469
      %v471 = vpop.f32.mrb[0].mxu0
      %472 = vmatprep.mubr.f32.mxu0 0.0
      %473 = vmatmul.mubr.f32.gmra.mrb[0].mxu0 %v395
      %v474 = vpop.f32.mrb[0].mxu0
      %v475 = vadd.f32 0.0, %v474
      %v476 = vpop.f32.mrb[0].mxu0
      %477 = vmatprep.mubr.f32.mxu0 0.0
      %478 = vmatmul.mubr.f32.gmra.mrb[0].mxu0 %v398
      %v479 = vpop.f32.mrb[0].mxu0
      %v480 = vadd.f32 0.0, %v479
      %v481 = vpop.f32.mrb[0].mxu0
      %482 = vmatprep.mubr.f32.mxu0 0.0
      %483 = vmatmul.mubr.f32.gmra.mrb[0].mxu0 %v401
      %v484 = vpop.f32.mrb[0].mxu0
      %v485 = vadd.f32 0.0, %v484
      %v486 = vpop.f32.mrb[0].mxu0
      %487 = vdwg.mxu0
      %vm488 = vcmask 64512
      %489 = vst.msk [vmem:[%s248] sm:$0xff] %vm488, %v373
      %490 = vst.msk [vmem:[%s248 + $0x8] sm:$0xff] %vm488, %v378
      %491 = vst.msk [vmem:[%s248 + $0x10] sm:$0xff] %vm488, %v383
      %492 = vst.msk [vmem:[%s248 + $0x18] sm:$0xff] %vm488, %v388
      %497 = vrot.lane.b32.xlu0 %v373, 120
      %v498 = vpop.permute.xlu0 %497
      %499 = vrot.lane.b32.xlu0 %v378, 120
      %v500 = vpop.permute.xlu0 %499
      %501 = vrot.lane.b32.xlu0 %v383, 120
      %v502 = vpop.permute.xlu0 %501
      %503 = vrot.lane.b32.xlu0 %v388, 120
      %v504 = vpop.permute.xlu0 %503
      %509 = vst.msk [vmem:[%s260] sm:$0xff] %vm488, %v498
      %510 = vst.msk [vmem:[%s260 + $0x8] sm:$0xff] %vm488, %v500
      %511 = vst.msk [vmem:[%s260 + $0x10] sm:$0xff] %vm488, %v502
      %512 = vst.msk [vmem:[%s260 + $0x18] sm:$0xff] %vm488, %v504
      %513 = vst.msk [vmem:[%s254] sm:$0xff] %vm488, %v470
      %514 = vst.msk [vmem:[%s254 + $0x8] sm:$0xff] %vm488, %v475
      %515 = vst.msk [vmem:[%s254 + $0x10] sm:$0xff] %vm488, %v480
      %516 = vst.msk [vmem:[%s254 + $0x18] sm:$0xff] %vm488, %v485
      %521 = vrot.lane.b32.xlu0 %v470, 120
      %v522 = vpop.permute.xlu0 %521
      %523 = vrot.lane.b32.xlu0 %v475, 120
      %v524 = vpop.permute.xlu0 %523
      %525 = vrot.lane.b32.xlu0 %v480, 120
      %v526 = vpop.permute.xlu0 %525
      %527 = vrot.lane.b32.xlu0 %v485, 120
      %v528 = vpop.permute.xlu0 %527
      %533 = vst.msk [vmem:[%s266] sm:$0xff] %vm488, %v522
      %534 = vst.msk [vmem:[%s266 + $0x8] sm:$0xff] %vm488, %v524
      %535 = vst.msk [vmem:[%s266 + $0x10] sm:$0xff] %vm488, %v526
      %536 = vst.msk [vmem:[%s266 + $0x18] sm:$0xff] %vm488, %v528
      %s537 = smul.u32 4, %s17
      %p538 = scmp.lt.s32.totalorder %s537, 7
      %s539 = scalar_select %p538, %s537, 7
      %s540 = smul.addr %s539, 8
      %s541 = scalar_lea.vmem %s2, %s540
      %s542 = smul.u32 4, %s17
      %p543 = scmp.lt.s32.totalorder %s542, 7
      %s544 = scalar_select %p543, %s542, 7
      %s545 = smul.addr %s544, 8
      %s546 = scalar_lea.vmem %s3, %s545
      %s547 = smul.u32 4, %s17
      %p548 = scmp.lt.s32.totalorder %s547, 7
      %s549 = scalar_select %p548, %s547, 7
      %s550 = smul.addr %s549, 8
      %s551 = scalar_lea.vmem %s4, %s550
      %s552 = smul.u32 4, %s17
      %p553 = scmp.lt.s32.totalorder %s552, 7
      %s554 = scalar_select %p553, %s552, 7
      %s555 = smul.addr %s554, 8
      %s556 = scalar_lea.vmem %s5, %s555
      // Predicated region
      $region29: #{tpu_custom_call.1} parent=27 // pred_check
        %p557 = pneg %p82
      $region30: #{tpu_custom_call.1} parent=27 // pred_check_branch
        %559 = sbr.rel (%p557) target = $region32
      $region31: #{tpu_custom_call.1} parent=27 // pred_region
        %s560 = smul.u32 4, %s17
      $region32: #{tpu_custom_call.1} parent=27 // pred_fallthru
        _
      // Predicated region
      $region33: #{tpu_custom_call.1} parent=27 // pred_check
        %p561 = pneg %p108
      $region34: #{tpu_custom_call.1} parent=27 // pred_check_branch
        %563 = sbr.rel (%p561) target = $region36
      $region35: #{tpu_custom_call.1} parent=27 // pred_region
        %s564 = smul.u32 4, %s17
      $region36: #{tpu_custom_call.1} parent=27 // pred_fallthru
        _
      // Predicated region
      $region37: #{tpu_custom_call.1} parent=27 // pred_check
        %p565 = pneg %p134
      $region38: #{tpu_custom_call.1} parent=27 // pred_check_branch
        %567 = sbr.rel (%p565) target = $region40
      $region39: #{tpu_custom_call.1} parent=27 // pred_region
        %s568 = smul.u32 4, %s17
      $region40: #{tpu_custom_call.1} parent=27 // pred_fallthru
        _
      // Predicated region
      $region41: #{tpu_custom_call.1} parent=27 // pred_check
        %p569 = pneg %p160
      $region42: #{tpu_custom_call.1} parent=27 // pred_check_branch
        %571 = sbr.rel (%p569) target = $region44
      $region43: #{tpu_custom_call.1} parent=27 // pred_region
        %s572 = smul.u32 4, %s17
      $region44: #{tpu_custom_call.1} parent=27 // pred_fallthru
        _
    $region28: #{tpu_custom_call.1} parent=5 // pred_fallthru
      _
    %p573 = scmp.le.s32.totalorder 2, %s12
    // Predicated region
    $region45: #{tpu_custom_call.1} parent=5 // pred_check
      %p574 = pneg %p573
    $region46: #{tpu_custom_call.1} parent=5 // pred_check_branch
      %576 = sbr.rel (%p574) target = $region48
    $region47: #{tpu_custom_call.1} parent=5 // pred_region
      %s577 = ssub.s32 %s12, 2
      // Predicated region
      $region49: #{tpu_custom_call.1} parent=47 // pred_check
        %p578 = pneg %p88
      $region50: #{tpu_custom_call.1} parent=47 // pred_check_branch
        %580 = sbr.rel (%p578) target = $region52
      $region51: #{tpu_custom_call.1} parent=47 // pred_region
        %s581 = smul.u32 4, %s18
        %p582 = scmp.lt.s32.totalorder %s581, 7
        %s583 = scalar_select %p582, %s581, 7
        %s584 = smul.addr %s583, 8
        %s585 = scalar_lea.vmem %s2, %s584
      $region52: #{tpu_custom_call.1} parent=47 // pred_fallthru
        _
      // Predicated region
      $region53: #{tpu_custom_call.1} parent=47 // pred_check
        %p586 = pneg %p114
      $region54: #{tpu_custom_call.1} parent=47 // pred_check_branch
        %588 = sbr.rel (%p586) target = $region56
      $region55: #{tpu_custom_call.1} parent=47 // pred_region
        %s589 = smul.u32 4, %s18
        %p590 = scmp.lt.s32.totalorder %s589, 7
        %s591 = scalar_select %p590, %s589, 7
        %s592 = smul.addr %s591, 8
        %s593 = scalar_lea.vmem %s3, %s592
      $region56: #{tpu_custom_call.1} parent=47 // pred_fallthru
        _
      // Predicated region
      $region57: #{tpu_custom_call.1} parent=47 // pred_check
        %p594 = pneg %p140
      $region58: #{tpu_custom_call.1} parent=47 // pred_check_branch
        %596 = sbr.rel (%p594) target = $region60
      $region59: #{tpu_custom_call.1} parent=47 // pred_region
        %s597 = smul.u32 4, %s18
        %p598 = scmp.lt.s32.totalorder %s597, 7
        %s599 = scalar_select %p598, %s597, 7
        %s600 = smul.addr %s599, 8
        %s601 = scalar_lea.vmem %s4, %s600
      $region60: #{tpu_custom_call.1} parent=47 // pred_fallthru
        _
      // Predicated region
      $region61: #{tpu_custom_call.1} parent=47 // pred_check
        %p602 = pneg %p166
      $region62: #{tpu_custom_call.1} parent=47 // pred_check_branch
        %604 = sbr.rel (%p602) target = $region64
      $region63: #{tpu_custom_call.1} parent=47 // pred_region
        %s605 = smul.u32 4, %s18
        %p606 = scmp.lt.s32.totalorder %s605, 7
        %s607 = scalar_select %p606, %s605, 7
        %s608 = smul.addr %s607, 8
        %s609 = scalar_lea.vmem %s5, %s608
      $region64: #{tpu_custom_call.1} parent=47 // pred_fallthru
        _
    $region48: #{tpu_custom_call.1} parent=5 // pred_fallthru
      _
  $region6: #{tpu_custom_call.1} parent=0 // loop_footer
    %s16 = sadd.s32 1, %s12
  $region7: #{tpu_custom_call.1} parent=0 // loop_footer_branch
    %11 = sbr.rel target = $region3
  $region8: #{tpu_custom_call.1} parent=0 // loop_exit
    _

</llo_original>
